<compile_context>
chip_gen: v7x
topology: tpu7x:2x2x1
jax: 0.10.0
libtpu: 0.0.40
codegen_flags: <defaults>
</compile_context>

<pallas_src>
import functools
import math

import jax
import jax.numpy as jnp
from jax.experimental import pallas as pl
from jax.experimental.pallas import tpu as pltpu


_MIN_GRID_BLOCKS = 4            # enough steps for prefetch/writeback overlap
_MIN_BLOCK_BYTES = 512 * 1024   # don't shrink blocks below this for grid depth


def _round_up(a, b):
    return -(-a // b) * b


def _sublane_multiple(dtype):
    itemsize = jnp.dtype(dtype).itemsize
    if itemsize >= 4:
        return 8
    if itemsize == 2:
        return 16
    return 32


@functools.lru_cache(maxsize=1)
def _memory_budgets():
    """(target_block_bytes, vmem_limit_bytes) tuned per TPU generation."""
    vmem_cap = None
    try:
        vmem_cap = int(pltpu.get_tpu_info().vmem_capacity_bytes)
    except Exception:
        vmem_cap = None
    if vmem_cap is not None and vmem_cap >= 96 * 1024 * 1024:
        # v5e / v6e: 128 MiB VMEM -> bigger blocks amortize per-step overhead.
        return 4 * 1024 * 1024, 64 * 1024 * 1024
    # v7x (64 MiB / TC) or unknown backend: stay conservative.
    return 2 * 1024 * 1024, 32 * 1024 * 1024


def _softmax_lastdim_kernel(x_ref, o_ref):
    # (tile_rows, cols) block; numerically stable softmax along the lane axis.
    # TODO(synk): for bf16 inputs on v6e/v7x, keep exp in bf16 (native bf16
    # EUP) and only the max/sum reductions in f32 to cut vreg pressure.
    x = x_ref[...].astype(jnp.float32)
    m = jnp.max(x, axis=-1, keepdims=True)
    e = jnp.exp(x - m)
    s = jnp.sum(e, axis=-1, keepdims=True)
    o_ref[...] = (e / s).astype(o_ref.dtype)


def _softmax_sublane_kernel(x_ref, o_ref):
    # (tile_pre, C, tile_post) block; reduce over the channel axis C on the
    # sublane dimension; the lane (last) axis stays dense -> unmasked stores.
    x = x_ref[...].astype(jnp.float32)
    m = jnp.max(x, axis=-2, keepdims=True)
    e = jnp.exp(x - m)
    s = jnp.sum(e, axis=-2, keepdims=True)
    o_ref[...] = (e / s).astype(o_ref.dtype)


def _softmax_last_dim(x2d):
    target_block_bytes, vmem_limit = _memory_budgets()
    rows, cols = x2d.shape
    dtype = x2d.dtype
    itemsize = jnp.dtype(dtype).itemsize
    sub = _sublane_multiple(dtype)
    cols_pad = _round_up(cols, 128)

    # Per-row VMEM bytes with (8,128) lane padding: input + output blocks, both
    # double-buffered, plus ~3 f32 temporaries (upcast x, exp, reduce headroom).
    row_vmem = cols_pad * (2 * 2 * itemsize + 3 * 4)
    vmem_budget = int(vmem_limit * 0.75)
    cap_rows = max(sub, (vmem_budget // row_vmem) // sub * sub)
    # TODO(synk): if even `sub` rows of padded cols exceed the VMEM budget
    # (vocab-sized reduce dims), add a column-tiled online-softmax path with an
    # 'arbitrary' trailing grid axis and m/l accumulators in VMEM scratch.

    if rows <= sub:
        tile_rows = rows
    else:
        in_row_bytes = cols_pad * itemsize
        total_bytes = _round_up(rows, sub) * in_row_bytes
        want_blocks = max(_MIN_GRID_BLOCKS,
                          pl.cdiv(total_bytes, target_block_bytes))
        max_blocks = max(1, total_bytes // _MIN_BLOCK_BYTES)
        n_blocks = max(1, min(want_blocks, max_blocks, rows // sub))
        tile_rows = _round_up(pl.cdiv(rows, n_blocks), sub)
        tile_rows = min(tile_rows, cap_rows, _round_up(rows, sub))

    grid = (pl.cdiv(rows, tile_rows),)

    return pl.pallas_call(
        _softmax_lastdim_kernel,
        out_shape=jax.ShapeDtypeStruct((rows, cols), dtype),
        grid_spec=pltpu.PrefetchScalarGridSpec(
            num_scalar_prefetch=0,
            grid=grid,
            in_specs=[pl.BlockSpec((tile_rows, cols), lambda i: (i, 0))],
            out_specs=pl.BlockSpec((tile_rows, cols), lambda i: (i, 0)),
        ),
        compiler_params=pltpu.CompilerParams(
            dimension_semantics=("parallel",),
            vmem_limit_bytes=vmem_limit,
        ),
    )(x2d)


def _softmax_sublane(x3d):
    target_block_bytes, vmem_limit = _memory_budgets()
    pre, C, post = x3d.shape
    dtype = x3d.dtype
    itemsize = jnp.dtype(dtype).itemsize
    sub = _sublane_multiple(dtype)
    C_pad = _round_up(C, sub)
    post_pad = _round_up(post, 128)

    # Lane tile: dense multiple of 128 (caller guarantees post >= 128).
    lane_budget = max(128,
                      (target_block_bytes // max(1, C_pad * itemsize)) // 128 * 128)
    tile_post = min(post_pad, 1024, lane_budget)
    n_post_blocks = pl.cdiv(post, tile_post)

    # Per-"pre" slab VMEM bytes with sublane/lane padding: in + out blocks,
    # double-buffered, plus ~3 f32 temporaries.
    slab_vmem = C_pad * tile_post * (2 * 2 * itemsize + 3 * 4)
    vmem_budget = int(vmem_limit * 0.75)
    cap_pre = max(1, vmem_budget // slab_vmem)
    # TODO(synk): very large C (C_pad * 128 lanes over the VMEM budget) needs an
    # online-softmax fallback along the sublane reduce axis as well.

    # Grid depth: >= _MIN_GRID_BLOCKS blocks when each stays >= _MIN_BLOCK_BYTES.
    total_bytes = pre * C_pad * post_pad * itemsize
    want_blocks = max(_MIN_GRID_BLOCKS, pl.cdiv(total_bytes, target_block_bytes))
    max_blocks = max(1, total_bytes // _MIN_BLOCK_BYTES)
    n_blocks = max(1, min(want_blocks, max_blocks))
    n_pre_blocks = min(pre, pl.cdiv(n_blocks, n_post_blocks))
    tile_pre = max(1, min(pl.cdiv(pre, n_pre_blocks), cap_pre))

    grid = (pl.cdiv(pre, tile_pre), n_post_blocks)

    return pl.pallas_call(
        _softmax_sublane_kernel,
        out_shape=jax.ShapeDtypeStruct((pre, C, post), dtype),
        grid_spec=pltpu.PrefetchScalarGridSpec(
            num_scalar_prefetch=0,
            grid=grid,
            in_specs=[pl.BlockSpec((tile_pre, C, tile_post),
                                   lambda i, j: (i, 0, j))],
            out_specs=pl.BlockSpec((tile_pre, C, tile_post),
                                   lambda i, j: (i, 0, j)),
        ),
        compiler_params=pltpu.CompilerParams(
            dimension_semantics=("parallel", "parallel"),
            vmem_limit_bytes=vmem_limit,
        ),
    )(x3d)


@functools.partial(jax.jit, static_argnames=("dimension",))
def simple_softmax(x, dimension=-1):
    """Pallas TPU implementation of torch.nn.functional.softmax(x, dimension)."""
    ndim = x.ndim
    dim = dimension % ndim
    shape = x.shape

    if dim == ndim - 1:
        # Softmax axis is already the lane axis: pure reshape, no transpose.
        cols = shape[-1]
        rows = math.prod(shape[:-1]) if ndim > 1 else 1
        return _softmax_last_dim(x.reshape(rows, cols)).reshape(shape)

    pre = math.prod(shape[:dim]) if dim > 0 else 1
    C = shape[dim]
    post = math.prod(shape[dim + 1:])

    if post >= 128:
        # Interior softmax axis with dense lanes (e.g. NCHW dim=1): keep the
        # memory layout, reduce over C on sublanes; reshapes only.
        return _softmax_sublane(x.reshape(pre, C, post)).reshape(shape)

    # post < 128: a lane width below 128 would force masked vst.msk stores for
    # the whole tensor; a single transpose pass that puts the reduce dim on the
    # lane axis (handled by XLA outside the kernel) is cheaper.
    xt = jnp.moveaxis(x, dim, -1)
    out = _softmax_last_dim(xt.reshape(-1, C)).reshape(xt.shape)
    return jnp.moveaxis(out, -1, dim)


if __name__ == "__main__":
    key = jax.random.PRNGKey(0)
    # Matches the torch_glow softmax test style: 4-D NCHW input, softmax over
    # the channel dimension (dimension=1) -> sublane-reduction path.
    x = jax.random.normal(key, (2, 4, 16, 16), dtype=jnp.float32)
    dimension = 1

    out = jax.block_until_ready(simple_softmax(x, dimension=dimension))
    ref = jax.nn.softmax(x, axis=dimension)
    assert out.shape == x.shape
    assert jnp.max(jnp.abs(out - ref)) < 1e-5

    # Last-dim (lane-reduction) path with a non-aligned shape.
    x2 = jax.random.normal(jax.random.PRNGKey(1), (2, 3, 40), dtype=jnp.float32)
    out2 = jax.block_until_ready(simple_softmax(x2, dimension=-1))
    assert jnp.max(jnp.abs(out2 - jax.nn.softmax(x2, axis=-1))) < 1e-5

    # Interior dim with small trailing extent (post < 128) -> transpose fallback.
    x3 = jax.random.normal(jax.random.PRNGKey(2), (2, 5, 4, 3), dtype=jnp.float32)
    out3 = jax.block_until_ready(simple_softmax(x3, dimension=1))
    assert jnp.max(jnp.abs(out3 - jax.nn.softmax(x3, axis=1))) < 1e-5

    print("KERNEL_OK")
</pallas_src>

<mosaic_0001>
module attributes {stable_mosaic.version = 11 : i64} {
  func.func @_softmax_sublane_kernel(%arg0: i32, %arg1: i32, %arg2: memref<2x4x256xf32, #tpu.memory_space<vmem>>, %arg3: memref<2x4x256xf32, #tpu.memory_space<vmem>>) attributes {dimension_semantics = [#tpu.dimension_semantics<parallel>, #tpu.dimension_semantics<parallel>], iteration_bounds = array<i64: 1, 1>, scalar_prefetch = 0 : i64, scratch_operands = 0 : i64, tpu.core_type = #tpu.core_type<tc>, window_params = [{transform_indices = @transform_0, window_bounds = array<i64: 2, 4, 256>}, {transform_indices = @transform_1, window_bounds = array<i64: 2, 4, 256>}]} {
    %c0 = arith.constant 0 : index
    %c0_0 = arith.constant 0 : index
    %c0_1 = arith.constant 0 : index
    %0 = vector.load %arg2[%c0, %c0_0, %c0_1] : memref<2x4x256xf32, #tpu.memory_space<vmem>>, vector<2x4x256xf32>
    %cst = arith.constant dense<0xFF800000> : vector<2x256xf32>
    %1 = vector.multi_reduction <maximumf>, %0, %cst [1] : vector<2x4x256xf32> to vector<2x256xf32>
    %2 = vector.shape_cast %1 : vector<2x256xf32> to vector<2x1x256xf32>
    %3 = vector.broadcast %2 : vector<2x1x256xf32> to vector<2x4x256xf32>
    %4 = arith.subf %0, %3 : vector<2x4x256xf32>
    %5 = math.exp %4 : vector<2x4x256xf32>
    %cst_2 = arith.constant dense<0.000000e+00> : vector<2x256xf32>
    %6 = vector.multi_reduction <add>, %5, %cst_2 [1] : vector<2x4x256xf32> to vector<2x256xf32>
    %7 = vector.shape_cast %6 : vector<2x256xf32> to vector<2x1x256xf32>
    %8 = vector.broadcast %7 : vector<2x1x256xf32> to vector<2x4x256xf32>
    %9 = arith.divf %5, %8 : vector<2x4x256xf32>
    %c0_3 = arith.constant 0 : index
    %c0_4 = arith.constant 0 : index
    %c0_5 = arith.constant 0 : index
    %10 = vector.load %arg3[%c0_3, %c0_4, %c0_5] : memref<2x4x256xf32, #tpu.memory_space<vmem>>, vector<2x4x256xf32>
    tpu.vector_store %arg3[%c0_3, %c0_4, %c0_5], %9 {strides = array<i32>} : memref<2x4x256xf32, #tpu.memory_space<vmem>>, vector<2x4x256xf32>,
    return
  }
  func.func @transform_0(%arg0: i32, %arg1: i32) -> (i32, i32, i32) {
    %c0_i32 = arith.constant 0 : i32
    %c0_i32_0 = arith.constant 0 : i32
    return %arg0, %c0_i32, %arg1 : i32, i32, i32
  }
  func.func @transform_1(%arg0: i32, %arg1: i32) -> (i32, i32, i32) {
    %c0_i32 = arith.constant 0 : i32
    %c0_i32_0 = arith.constant 0 : i32
    return %arg0, %c0_i32, %arg1 : i32, i32, i32
  }
}

</mosaic_0001>

<llo_original>
// kernel: simple_softmax.1
$region0: #{simple_softmax.1}
  #allocation0 [shape = 'u32[]', space=smem, size = 0x4, offset = 0x4, fixed_abs, tag = 'smem constant byte address 0x4 - core index']
  #allocation1 [shape = 'u32[144,128]{1,0:T(1,128)}', space=vmem, size = 0x12000, scoped, tag = 'internal scratch']
  %s0 = inlined_call_operand.vmem [shape: f32[2,4,256], index: 0, kind: input, shape index: {}]
  %s1 = inlined_call_operand.vmem [shape: f32[2,4,256], index: 1, kind: output, shape index: {}]
  %s2 = sld [smem:[#allocation0]]
  $region14: #{simple_softmax.1} parent=0
    _
  %s4 = ssub.s32 1, %s2
  %s5 = scalar_select 0, %s4, %s2
  // Predicated region
  $region2: #{simple_softmax.1} parent=0 // pred_check
    _
  $region3: #{simple_softmax.1} parent=0 // pred_check_branch
    %7 = sbr.rel (0) target = $region5
  $region4: #{simple_softmax.1} parent=0 // pred_region
    _
  $region5: #{simple_softmax.1} parent=0 // pred_fallthru
    _
  %v8 = vld [vmem:[%s0] sm:$0xff]
  %v9 = vld [vmem:[%s0 + $0x8] sm:$0xff]
  %v12 = vcombine.high %v8, %v8
  %v13 = vcombine.high %v9, %v9
  %vm16 = vcmask 1043456
  %v17 = vsel %vm16, %v8, -inf
  %v18 = vrot.slane %v17, 4
  %v19 = vmax.f32 %v17, %v18
  %v20 = vrot.slane %v19, 2
  %v21 = vmax.f32 %v19, %v20
  %v22 = vrot.slane %v21, 1
  %v23 = vmax.f32 %v21, %v22
  %v24 = vsel %vm16, %v12, -inf
  %v25 = vrot.slane %v24, 4
  %v26 = vmax.f32 %v24, %v25
  %v27 = vrot.slane %v26, 2
  %v28 = vmax.f32 %v26, %v27
  %v29 = vrot.slane %v28, 1
  %v30 = vmax.f32 %v28, %v29
  %v31 = vsel %vm16, %v9, -inf
  %v32 = vrot.slane %v31, 4
  %v33 = vmax.f32 %v31, %v32
  %v34 = vrot.slane %v33, 2
  %v35 = vmax.f32 %v33, %v34
  %v36 = vrot.slane %v35, 1
  %v37 = vmax.f32 %v35, %v36
  %v38 = vsel %vm16, %v13, -inf
  %v39 = vrot.slane %v38, 4
  %v40 = vmax.f32 %v38, %v39
  %v41 = vrot.slane %v40, 2
  %v42 = vmax.f32 %v40, %v41
  %v43 = vrot.slane %v42, 1
  %v44 = vmax.f32 %v42, %v43
  %v49 = vcombine.low %v23, %v30
  %v50 = vcombine.low %v37, %v44
  %v53 = vsub.f32 %v8, %v49
  %v54 = vsub.f32 %v9, %v50
  %v55 = vmul.f32 %v53, 1.442695
  %v56 = vpow.pop %v55
  %v57 = vmul.f32 %v54, 1.442695
  %v58 = vpow.pop %v57
  %v61 = vcombine.high %v56, %v56
  %v62 = vcombine.high %v58, %v58
  %v65 = vsel %vm16, %v56, 0.0
  %v66 = vrot.slane %v65, 4
  %v67 = vadd.f32 %v65, %v66
  %v68 = vrot.slane %v67, 2
  %v69 = vadd.f32 %v67, %v68
  %v70 = vrot.slane %v69, 1
  %v71 = vadd.f32 %v69, %v70
  %v72 = vsel %vm16, %v61, 0.0
  %v73 = vrot.slane %v72, 4
  %v74 = vadd.f32 %v72, %v73
  %v75 = vrot.slane %v74, 2
  %v76 = vadd.f32 %v74, %v75
  %v77 = vrot.slane %v76, 1
  %v78 = vadd.f32 %v76, %v77
  %v79 = vsel %vm16, %v58, 0.0
  %v80 = vrot.slane %v79, 4
  %v81 = vadd.f32 %v79, %v80
  %v82 = vrot.slane %v81, 2
  %v83 = vadd.f32 %v81, %v82
  %v84 = vrot.slane %v83, 1
  %v85 = vadd.f32 %v83, %v84
  %v86 = vsel %vm16, %v62, 0.0
  %v87 = vrot.slane %v86, 4
  %v88 = vadd.f32 %v86, %v87
  %v89 = vrot.slane %v88, 2
  %v90 = vadd.f32 %v88, %v89
  %v91 = vrot.slane %v90, 1
  %v92 = vadd.f32 %v90, %v91
  %v97 = vcombine.low %v71, %v78
  %v98 = vcombine.low %v85, %v92
  %v101 = vrcp.pop %v97
  %v102 = vmul.f32 %v56, %v101
  %v103 = vrcp.pop %v98
  %v104 = vmul.f32 %v58, %v103
  %105 = vst [vmem:[%s1] sm:$0xff] %v102
  %106 = vst [vmem:[%s1 + $0x8] sm:$0xff] %v104
  // Predicated region
  $region6: #{simple_softmax.1} parent=0 // pred_check
    _
  $region7: #{simple_softmax.1} parent=0 // pred_check_branch
    %108 = sbr.rel (0) target = $region9
  $region8: #{simple_softmax.1} parent=0 // pred_region
    _
  $region9: #{simple_softmax.1} parent=0 // pred_fallthru
    _
  // Predicated region
  $region10: #{simple_softmax.1} parent=0 // pred_check
    _
  $region11: #{simple_softmax.1} parent=0 // pred_check_branch
    %110 = sbr.rel (0) target = $region13
  $region12: #{simple_softmax.1} parent=0 // pred_region
    _
  $region13: #{simple_softmax.1} parent=0 // pred_fallthru
    _

</llo_original>
